<compile_context>
chip_gen: v7x
topology: tpu7x:2x2x1
jax: 0.10.0
libtpu: 0.0.40
codegen_flags: <defaults>
</compile_context>

<pallas_src>
import functools

import jax
import jax.numpy as jnp
from jax.experimental import pallas as pl
from jax.experimental.pallas import tpu as pltpu

_BLOCK_BUDGET_BYTES = 2 * 1024 * 1024   # ~2 MiB/block -> ~8 MiB double-buffered
_VMEM_LIMIT_BYTES = 32 * 1024 * 1024    # > v5e 16 MiB default, < v7x 64 MiB


def _transpose_flatten(x, out_shape):
    """(Bt, C, Wt) -> out_shape == (Bt, 1, Wt*C), w-major / c-minor order."""
    bt, c, wt = x.shape
    if hasattr(pltpu, "einshape"):
        try:
            # Single fused relayout (transpose + flatten) when grouped
            # einshape equations are supported by this build.
            y = pltpu.einshape("bcw->b(wc)", x)
            if y.shape == (bt, wt * c):
                return y.reshape(out_shape)  # only re-adds the size-1 axis
        except Exception:
            pass
    # Fallback: XLU transpose followed by a lane-collapse reshape.
    return jnp.swapaxes(x, 1, 2).reshape(out_shape)


def _im2seq_kernel_flat(x_ref, o_ref):
    # x block: (Bt, C, Wt) -> o block: (Bt, 1, Wt*C)  (lane-dense stores).
    o_ref[...] = _transpose_flatten(x_ref[...], o_ref.shape)


def _im2seq_kernel_direct(x_ref, o_ref):
    # x block: (Bt, C, Wt) -> o block: (Bt, Wt, C).
    o_ref[...] = jnp.swapaxes(x_ref[...], 1, 2)


def _pick_tiles(B, C, W, itemsize):
    """Joint (Bt, Wt) picker targeting ~_BLOCK_BUDGET_BYTES per block."""
    row_bytes = max(1, C * itemsize)
    wt_budget = max(128, (_BLOCK_BUDGET_BYTES // row_bytes) // 128 * 128)
    if W <= wt_budget:
        Wt = int(W)
        Bt = int(max(1, min(B, _BLOCK_BUDGET_BYTES // max(1, C * W * itemsize))))
    else:
        Wt = int(wt_budget)
        Bt = 1
    # Guarantee >= 2 grid steps when possible (feeds both v7x TensorCores).
    if pl.cdiv(B, Bt) * pl.cdiv(W, Wt) == 1:
        if B >= 2:
            Bt = int(pl.cdiv(B, 2))
        elif W > 128:
            Wt = int(max(128, (W // 2) // 128 * 128))
    return Bt, Wt


def _build_call(B, C, W, dtype, Bt, Wt, flat):
    grid = (pl.cdiv(B, Bt), pl.cdiv(W, Wt))
    itemsize = jnp.dtype(dtype).itemsize
    in_spec = pl.BlockSpec((Bt, C, Wt), lambda b, w: (b, 0, w))
    cost = pl.CostEstimate(flops=0, transcendentals=0,
                           bytes_accessed=2 * B * C * W * itemsize)
    params = pltpu.CompilerParams(
        dimension_semantics=("parallel", "parallel"),
        vmem_limit_bytes=_VMEM_LIMIT_BYTES)

    if flat:
        # Lane-dense flattened output slab (unmasked stores even for C < 128).
        out_shape = jax.ShapeDtypeStruct((B, 1, W * C), dtype)
        out_spec = pl.BlockSpec((Bt, 1, Wt * C), lambda b, w: (b, 0, w))
        kernel = _im2seq_kernel_flat
    else:
        # Direct (B, W, C) blocks (stores masked only when C % 128 != 0).
        out_shape = jax.ShapeDtypeStruct((B, W, C), dtype)
        out_spec = pl.BlockSpec((Bt, Wt, C), lambda b, w: (b, w, 0))
        kernel = _im2seq_kernel_direct

    call = pl.pallas_call(
        kernel,
        out_shape=out_shape,
        grid=grid,
        in_specs=[in_spec],
        out_specs=out_spec,
        compiler_params=params,
        cost_estimate=cost,
    )

    def run(x3):
        out = call(x3)
        return out.reshape(B, W, C)  # contiguous -> free for both paths
    return run


@functools.lru_cache(maxsize=None)
def _flat_path_ok(B, C, W, dtype_name, Bt, Wt):
    """Static (per-shape, cached) gate for the lane-dense flat path.

    Compiles AND numerically validates the flat kernel against the reference
    permute.  A runtime try/except around the production call would not
    catch Mosaic lowering failures under an outer jax.jit, so gate here.
    """
    try:
        dtype = jnp.dtype(dtype_name)
        fn = jax.jit(_build_call(B, C, W, dtype, Bt, Wt, flat=True))
        x = (jnp.arange(B * C * W, dtype=jnp.float32) % 251.0).astype(dtype)
        x = x.reshape(B, C, W)
        got = jax.block_until_ready(fn(x))
        want = jnp.transpose(x, (0, 2, 1))
        return bool(jnp.array_equal(got, want))
    except Exception:
        return False


def im2seq(x, *, block_b=None, block_w=None):
    """x: (B, C, H, W) with H == 1  ->  (B, W, C)."""
    B, C, H, W = x.shape
    assert H == 1, "Im2Seq requires H == 1"
    x3 = x.reshape(B, C, W)  # drop size-1 H axis (no data movement)

    Bt, Wt = _pick_tiles(B, C, W, jnp.dtype(x.dtype).itemsize)
    if block_b is not None:
        Bt = min(int(block_b), B)
    if block_w is not None:
        Wt = min(int(block_w), W)
    if Wt < W:
        assert Wt % 128 == 0, "W tile must be lane-aligned (multiple of 128)"

    want_flat = (C % 128) != 0  # flatten only when it removes masked stores
    flat = want_flat and _flat_path_ok(B, C, W, jnp.dtype(x.dtype).name, Bt, Wt)
    return _build_call(B, C, W, x.dtype, Bt, Wt, flat)(x3)


def _reference(x):
    B, C, H, W = x.shape
    return jnp.transpose(x.reshape(B, C, W), (0, 2, 1))


if __name__ == "__main__":
    # Im2Seq has no parameters (out_channels == in_channels): nothing to init.
    key = jax.random.PRNGKey(0)

    # 1) Module-sized shape: ragged C -> lane-dense flat path, 2-step grid.
    x1 = jax.random.normal(key, (2, 4, 1, 16), dtype=jnp.float32)
    o1 = jax.block_until_ready(im2seq(x1))
    assert o1.shape == (2, 16, 4) and o1.dtype == x1.dtype
    assert jnp.array_equal(o1, _reference(x1))

    # 2) Ragged C with W split into 128-wide tiles and a partial last tile
    #    (exercises flat-path boundary clipping: W % Wt != 0).
    x2 = jax.random.normal(key, (1, 12, 1, 300), dtype=jnp.float32)
    o2 = jax.block_until_ready(im2seq(x2, block_w=128))
    assert o2.shape == (1, 300, 12)
    assert jnp.array_equal(o2, _reference(x2))

    # 3) Lane-aligned C -> direct (Bt, Wt, C)-block path.
    x3 = jax.random.normal(key, (2, 128, 1, 16), dtype=jnp.float32)
    o3 = jax.block_until_ready(im2seq(x3))
    assert o3.shape == (2, 16, 128)
    assert jnp.array_equal(o3, _reference(x3))

    print("KERNEL_OK")
</pallas_src>

<mosaic_0001>
module attributes {stable_mosaic.version = 11 : i64} {
  func.func @_im2seq_kernel_direct(%arg0: i32, %arg1: i32, %arg2: memref<1x4x16xf32, #tpu.memory_space<vmem>>, %arg3: memref<1x16x4xf32, #tpu.memory_space<vmem>>) attributes {dimension_semantics = [#tpu.dimension_semantics<parallel>, #tpu.dimension_semantics<parallel>], iteration_bounds = array<i64: 2, 1>, scalar_prefetch = 0 : i64, scratch_operands = 0 : i64, tpu.core_type = #tpu.core_type<tc>, window_params = [{transform_indices = @transform_0, window_bounds = array<i64: 1, 4, 16>}, {transform_indices = @transform_1, window_bounds = array<i64: 1, 16, 4>}]} {
    %c0 = arith.constant 0 : index
    %c0_0 = arith.constant 0 : index
    %c0_1 = arith.constant 0 : index
    %0 = vector.load %arg2[%c0, %c0_0, %c0_1] : memref<1x4x16xf32, #tpu.memory_space<vmem>>, vector<1x4x16xf32>
    %1 = tpu.transpose %0, [0, 2, 1] : vector<1x4x16xf32> -> vector<1x16x4xf32>
    %c0_2 = arith.constant 0 : index
    %c0_3 = arith.constant 0 : index
    %c0_4 = arith.constant 0 : index
    %2 = vector.load %arg3[%c0_2, %c0_3, %c0_4] : memref<1x16x4xf32, #tpu.memory_space<vmem>>, vector<1x16x4xf32>
    tpu.vector_store %arg3[%c0_2, %c0_3, %c0_4], %1 {strides = array<i32>} : memref<1x16x4xf32, #tpu.memory_space<vmem>>, vector<1x16x4xf32>,
    return
  }
  func.func @transform_0(%arg0: i32, %arg1: i32) -> (i32, i32, i32) {
    %c0_i32 = arith.constant 0 : i32
    %c0_i32_0 = arith.constant 0 : i32
    return %arg0, %c0_i32, %arg1 : i32, i32, i32
  }
  func.func @transform_1(%arg0: i32, %arg1: i32) -> (i32, i32, i32) {
    %c0_i32 = arith.constant 0 : i32
    %c0_i32_0 = arith.constant 0 : i32
    return %arg0, %arg1, %c0_i32 : i32, i32, i32
  }
}

</mosaic_0001>

<llo_original>
// kernel: tpu_custom_call.1
$region0: #{tpu_custom_call.1}
  #allocation0 [shape = 'u32[]', space=smem, size = 0x4, offset = 0x4, fixed_abs, tag = 'smem constant byte address 0x4 - core index']
  #allocation1 [shape = 'u32[144,128]{1,0:T(1,128)}', space=vmem, size = 0x12000, scoped, tag = 'internal scratch']
  %s0 = inlined_call_operand.hbm [shape: f32[2,4,16], index: 0, kind: input, shape index: {}]
  %s1 = inlined_call_operand.vmem [shape: f32[2,16,4], index: 1, kind: output, shape index: {}]
  %s2 = sld [smem:[#allocation0]]
  $region41: #{tpu_custom_call.1} parent=0
    _
  %s4 = ssub.s32 1, %s2
  %s5 = scalar_select 0, %s4, %s2
  $region1: #{tpu_custom_call.1} parent=0
    #allocation2 [shape = 'u8[4096]{0}', space=vmem, size = 0x1000, scoped, tag = 'input window, operand 0']
    #allocation3 [shape = 's32[2]{0}', space=sflag, size = 0x8, scoped, tag = 'scoped memory for tpu_custom_call.1']
    %6 = vsyncpa [#allocation3], 0
    %s7 = scalar_lea.sflag [#allocation3], 1
    %8 = vsyncpa %s7, 0
    loop: start=0, step=1, limit=4
    $region2: #{tpu_custom_call.1} parent=1 // loop_pre_header
      _
    $region3: #{tpu_custom_call.1} parent=1 // loop_header
      %s10 = sphi 0, %s14
      %p11 = scmp.ge.s32.totalorder %s10, 4
      %s17 = sphi 0, %s29
      %s18 = sphi 0, %s25
      %s19 = sphi 0, %s17
      %s20 = sphi 0, %s18
      %s21 = sphi 0, %s19
      %s22 = sphi 0, %s20
      %s34 = sphi 0, %s36
      %s37 = sphi 0, %s34
      %s38 = sphi 0, %s37
      %s54 = sphi 0, %s38
      %s62 = sphi 0, %s64
      %s65 = sphi 0, %s62
      %s66 = sphi 0, %s65
      %s82 = sphi 0, %s66
    $region4: #{tpu_custom_call.1} parent=1 // loop_header_branch
      %13 = sbr.rel (%p11) target = $region8
    $region5: #{tpu_custom_call.1} parent=1 // loop_body
      %s15 = ssub.s32 %s10, 1
      %s16 = ssub.s32 %s10, 2
      %s23 = sadd.s32 1, %s18
      %p24 = scmp.ge.s32.totalorder %s23, 1
      %s25 = scalar_select %p24, 0, %s23
      %s26 = sadd.s32 1, %s17
      %s27 = scalar_select %p24, %s26, %s17
      %p28 = scmp.ge.s32.totalorder %s27, 2
      %s29 = scalar_select %p28, 0, %s27
      %s30 = ssub.s32 %s17, %s29
      %s31 = ssub.s32 %s18, %s25
      %s32 = sor.u32 %s30, %s31
      %p33 = scmp.eq.s32.totalorder %s32, 0
      %s35 = sadd.s32 %s34, 1
      %s36 = scalar_select %p33, %s34, %s35
      %p39 = pneg %p33
      %p40 = scmp.eq.s32.totalorder %s10, 1
      %p41 = por %p39, %p40
      %p42 = scmp.ne.s32.totalorder %s34, %s37
      %p43 = scmp.eq.s32.totalorder %s10, 0
      %p44 = por %p42, %p43
      %p45 = scmp.ne.s32.totalorder %s34, %s37
      %p46 = scmp.eq.s32.totalorder %s15, 1
      %p47 = por %p45, %p46
      %p48 = scmp.ne.s32.totalorder %s37, %s38
      %p49 = scmp.eq.s32.totalorder %s15, 0
      %p50 = por %p48, %p49
      %p51 = scmp.ne.s32.totalorder %s37, %s38
      %p52 = scmp.eq.s32.totalorder %s16, 1
      %p53 = por %p51, %p52
      %p55 = scmp.ne.s32.totalorder %s38, %s54
      %p56 = scmp.eq.s32.totalorder %s16, 0
      %p57 = por %p55, %p56
      %s58 = ssub.s32 %s17, %s29
      %s59 = ssub.s32 %s18, %s25
      %s60 = sor.u32 %s58, %s59
      %p61 = scmp.eq.s32.totalorder %s60, 0
      %s63 = sadd.s32 %s62, 1
      %s64 = scalar_select %p61, %s62, %s63
      %p67 = pneg %p61
      %p68 = scmp.eq.s32.totalorder %s10, 1
      %p69 = por %p67, %p68
      %p70 = scmp.ne.s32.totalorder %s62, %s65
      %p71 = scmp.eq.s32.totalorder %s10, 0
      %p72 = por %p70, %p71
      %p73 = scmp.ne.s32.totalorder %s62, %s65
      %p74 = scmp.eq.s32.totalorder %s15, 1
      %p75 = por %p73, %p74
      %p76 = scmp.ne.s32.totalorder %s65, %s66
      %p77 = scmp.eq.s32.totalorder %s15, 0
      %p78 = por %p76, %p77
      %p79 = scmp.ne.s32.totalorder %s65, %s66
      %p80 = scmp.eq.s32.totalorder %s16, 1
      %p81 = por %p79, %p80
      %p83 = scmp.ne.s32.totalorder %s66, %s82
      %p84 = scmp.eq.s32.totalorder %s16, 0
      %p85 = por %p83, %p84
      %p86 = scmp.le.s32.totalorder 1, %s10
      %p87 = scmp.lt.s32.totalorder %s10, 3
      %p88 = pnand %p86, %p87
      %p89 = pneg %p88
      // Predicated region
      $region9: #{tpu_custom_call.1} parent=5 // pred_check
        _
      $region10: #{tpu_custom_call.1} parent=5 // pred_check_branch
        %91 = sbr.rel (%p88) target = $region12
      $region11: #{tpu_custom_call.1} parent=5 // pred_region
        %s92 = ssub.s32 %s10, 1
      $region12: #{tpu_custom_call.1} parent=5 // pred_fallthru
        _
      %p93 = scmp.lt.s32.totalorder %s10, 2
      // Predicated region
      $region13: #{tpu_custom_call.1} parent=5 // pred_check
        %p94 = pneg %p93
      $region14: #{tpu_custom_call.1} parent=5 // pred_check_branch
        %96 = sbr.rel (%p94) target = $region16
      $region15: #{tpu_custom_call.1} parent=5 // pred_region
        // Predicated region
        $region17: #{tpu_custom_call.1} parent=15 // pred_check
          %p97 = pneg %p44
        $region18: #{tpu_custom_call.1} parent=15 // pred_check_branch
          %99 = sbr.rel (%p97) target = $region20
        $region19: #{tpu_custom_call.1} parent=15 // pred_region
          %s100 = sand.u32 %s34, 1
          %s101 = scalar_lea.sflag [#allocation3], %s100
          %s102 = sand.u32 %s34, 1
          %s103 = smul.addr %s102, 4
          %s104 = scalar_lea.vmem [#allocation2], %s103
          %s106 = ssub.s32 64, 64
          %107 = vsyncadd %s101, %s106
          %s108 = sadd.s32 %s18, %s17
          %s109 = smul.addr %s108, 64
          %s110 = scalar_lea.hbm %s0, %s109
          %s112 = sshll.u32 %s104, 4
          %s113 = int_to_ptr.vmem [resolvable:$true] %s112
          %115 = dma.hbm_to_vmem [thread:$0]  %s110, 64, %s113, %s101
        $region20: #{tpu_custom_call.1} parent=15 // pred_fallthru
          _
      $region16: #{tpu_custom_call.1} parent=5 // pred_fallthru
        _
      %p116 = scmp.le.s32.totalorder 1, %s10
      %p117 = scmp.lt.s32.totalorder %s10, 3
      %p118 = pnand %p116, %p117
      %p119 = pneg %p118
      // Predicated region
      $region21: #{tpu_custom_call.1} parent=5 // pred_check
        _
      $region22: #{tpu_custom_call.1} parent=5 // pred_check_branch
        %121 = sbr.rel (%p118) target = $region24
      $region23: #{tpu_custom_call.1} parent=5 // pred_region
        %s122 = ssub.s32 %s10, 1
        %s123 = sand.u32 %s37, 1
        %s124 = scalar_lea.sflag [#allocation3], %s123
        %s125 = sand.u32 %s37, 1
        %s126 = smul.addr %s125, 4
        %s127 = scalar_lea.vmem [#allocation2], %s126
        // Predicated region
        $region25: #{tpu_custom_call.1} parent=23 // pred_check
          %p128 = pneg %p50
        $region26: #{tpu_custom_call.1} parent=23 // pred_check_branch
          %130 = sbr.rel (%p128) target = $region28
        $region27: #{tpu_custom_call.1} parent=23 // pred_region
          %131 = dma.done %s124, 64
        $region28: #{tpu_custom_call.1} parent=23 // pred_fallthru
          _
        %s132 = sand.u32 %s37, 1
        %s133 = scalar_lea.sflag [#allocation3], %s132
        %s134 = sand.u32 %s37, 1
        %s135 = smul.addr %s134, 4
        %s136 = scalar_lea.vmem [#allocation2], %s135
        %p137 = pneg %p50
        %p138 = pneg %p47
        %p139 = pneg %p78
        %p140 = pneg %p75
        %s141 = smul.u32 2, %s20
        %p142 = scmp.lt.s32.totalorder %s19, 1
        %s143 = scalar_select %p142, %s19, 1
        %p144 = scmp.lt.s32.totalorder %s141, 1
        %s145 = scalar_select %p144, %s141, 1
        %s146 = smul.addr %s143, 2
        %s147 = sadd.s32 %s145, %s146
        %s148 = smul.addr %s147, 8
        %s149 = scalar_lea.vmem %s1, %s148
        %s150 = smul.u32 2, %s20
        %p151 = scmp.lt.s32.totalorder %s19, 1
        %s152 = scalar_select %p151, %s19, 1
        %p153 = scmp.lt.s32.totalorder %s150, 1
        %s154 = scalar_select %p153, %s150, 1
        %s155 = smul.addr %s152, 2
        %s156 = sadd.s32 %s154, %s155
        %s157 = smul.addr %s156, 8
        %s158 = scalar_lea.vmem %s1, %s157
        %s159 = smul.u32 2, %s20
        %v160 = vld [vmem:[%s127] sm:$0xf]
        %161 = vxpose.xlu0.b32.start [1/16] %v160, 128
        %162 = vxpose.xlu0.b32.cont [2/16] 0.0, 128
        %163 = vxpose.xlu0.b32.cont [3/16] 0.0, 128
        %164 = vxpose.xlu0.b32.cont [4/16] 0.0, 128
        %165 = vxpose.xlu0.b32.cont [5/16] 0.0, 128
        %166 = vxpose.xlu0.b32.cont [6/16] 0.0, 128
        %167 = vxpose.xlu0.b32.cont [7/16] 0.0, 128
        %168 = vxpose.xlu0.b32.cont [8/16] 0.0, 128
        %169 = vxpose.xlu0.b32.cont [9/16] 0.0, 128
        %170 = vxpose.xlu0.b32.cont [10/16] 0.0, 128
        %171 = vxpose.xlu0.b32.cont [11/16] 0.0, 128
        %172 = vxpose.xlu0.b32.cont [12/16] 0.0, 128
        %173 = vxpose.xlu0.b32.cont [13/16] 0.0, 128
        %174 = vxpose.xlu0.b32.cont [14/16] 0.0, 128
        %175 = vxpose.xlu0.b32.cont [15/16] 0.0, 128
        %176 = vxpose.xlu0.b32.end [16/16] 0.0, 128
        %v177 = vpop.trf.xlu0
        %v178 = vpop.trf.xlu0
        %v179 = vpop.trf.xlu0
        %v180 = vpop.trf.xlu0
        %v181 = vpop.trf.xlu0
        %v182 = vpop.trf.xlu0
        %v183 = vpop.trf.xlu0
        %v184 = vpop.trf.xlu0
        %v185 = vpop.trf.xlu0
        %v186 = vpop.trf.xlu0
        %v187 = vpop.trf.xlu0
        %v188 = vpop.trf.xlu0
        %v189 = vpop.trf.xlu0
        %v190 = vpop.trf.xlu0
        %v191 = vpop.trf.xlu0
        %v192 = vpop.trf.xlu0
        %vm193 = vcmask 31744
        %194 = vst.msk [vmem:[%s158] sm:$0xff] %vm193, %v177
        %195 = vst.msk [vmem:[%s158 + $0x8] sm:$0xff] %vm193, %v178
        %s196 = smul.u32 2, %s20
        %p197 = scmp.lt.s32.totalorder %s19, 1
        %s198 = scalar_select %p197, %s19, 1
        %p199 = scmp.lt.s32.totalorder %s196, 1
        %s200 = scalar_select %p199, %s196, 1
        %s201 = smul.addr %s198, 2
        %s202 = sadd.s32 %s200, %s201
        %s203 = smul.addr %s202, 8
        %s204 = scalar_lea.vmem %s1, %s203
        // Predicated region
        $region29: #{tpu_custom_call.1} parent=23 // pred_check
          %p205 = pneg %p75
        $region30: #{tpu_custom_call.1} parent=23 // pred_check_branch
          %207 = sbr.rel (%p205) target = $region32
        $region31: #{tpu_custom_call.1} parent=23 // pred_region
          %s208 = smul.u32 2, %s20
        $region32: #{tpu_custom_call.1} parent=23 // pred_fallthru
          _
      $region24: #{tpu_custom_call.1} parent=5 // pred_fallthru
        _
      %p209 = scmp.le.s32.totalorder 2, %s10
      // Predicated region
      $region33: #{tpu_custom_call.1} parent=5 // pred_check
        %p210 = pneg %p209
      $region34: #{tpu_custom_call.1} parent=5 // pred_check_branch
        %212 = sbr.rel (%p210) target = $region36
      $region35: #{tpu_custom_call.1} parent=5 // pred_region
        %s213 = ssub.s32 %s10, 2
        // Predicated region
        $region37: #{tpu_custom_call.1} parent=35 // pred_check
          %p214 = pneg %p81
        $region38: #{tpu_custom_call.1} parent=35 // pred_check_branch
          %216 = sbr.rel (%p214) target = $region40
        $region39: #{tpu_custom_call.1} parent=35 // pred_region
          %s217 = smul.u32 2, %s22
          %p218 = scmp.lt.s32.totalorder %s21, 1
          %s219 = scalar_select %p218, %s21, 1
          %p220 = scmp.lt.s32.totalorder %s217, 1
          %s221 = scalar_select %p220, %s217, 1
          %s222 = smul.addr %s219, 2
          %s223 = sadd.s32 %s221, %s222
          %s224 = smul.addr %s223, 8
          %s225 = scalar_lea.vmem %s1, %s224
        $region40: #{tpu_custom_call.1} parent=35 // pred_fallthru
          _
      $region36: #{tpu_custom_call.1} parent=5 // pred_fallthru
        _
    $region6: #{tpu_custom_call.1} parent=1 // loop_footer
      %s14 = sadd.s32 1, %s10
    $region7: #{tpu_custom_call.1} parent=1 // loop_footer_branch
      %9 = sbr.rel target = $region3
    $region8: #{tpu_custom_call.1} parent=1 // loop_exit
      _
    %226 = vsyncpa [#allocation3], 1
    %s227 = scalar_lea.sflag [#allocation3], 1
    %228 = vsyncpa %s227, 1

</llo_original>
